<compile_context>
chip_gen: v5e
topology: v5e:2x2
jax: 0.10.0
libtpu: 0.0.40
codegen_flags: <defaults>
</compile_context>

<pallas_src>
import functools
import math

import jax
import jax.numpy as jnp
import numpy as np
from jax.experimental import pallas as pl
from jax.experimental.pallas import tpu as pltpu


# ----------------------------------------------------------------------------
# Helpers
# ----------------------------------------------------------------------------
@functools.lru_cache(maxsize=None)
def _default_block_target():
    """Row-tile target: 1024 on chips with >=96 MiB VMEM (v5e/v6e: ~86% of HBM
    roofline at 1024 vs ~85% at 512, half the per-step overhead), 512 elsewhere
    (v7x has 64 MiB VMEM per TensorCore and 2 cores to keep evenly fed)."""
    try:
        if pltpu.get_tpu_info().vmem_capacity_bytes >= 96 * 1024 * 1024:
            return 1024
    except Exception:  # no TPU / API difference: stay conservative
        pass
    return 512


def _auto_block_m(m_rows):
    """Pick the row-tile size.

    Small inputs get one full-extent tile (block == array extent is always
    layout-legal, no ragged stores).  Large inputs get target-sized tiles, but
    we keep >= 4 grid steps when possible so the v7x megacore split of the
    "parallel" row axis stays even.
    """
    target = _default_block_target()
    if m_rows <= target:
        return m_rows
    bm = target
    while bm > 128 and pl.cdiv(m_rows, bm) < 4:
        bm //= 2
    return bm


def _resident_spec(block_shape, index_map):
    """BlockSpec for operands resident across the whole grid (constant
    index_map): single pipeline buffer -- the default second buffer is never
    refilled and only burns VMEM."""
    try:
        return pl.BlockSpec(block_shape, index_map,
                            pipeline_mode=pl.Buffered(1))
    except (TypeError, AttributeError):   # older jax without pipeline_mode
        return pl.BlockSpec(block_shape, index_map)


def _compiler_params():
    # All grids here are a single "parallel" row (or batch*head) axis.
    # 32 MiB fits v5e..v7x scoped budgets for BERT-sized H (< ~2048); chips
    # that picked 1024-row tiles (>= 96 MiB VMEM) get a 64 MiB cap as headroom.
    vmem_limit = (64 if _default_block_target() >= 1024 else 32) * 1024 * 1024
    return pltpu.CompilerParams(dimension_semantics=("parallel",),
                                vmem_limit_bytes=vmem_limit)


def _activation(y, name):
    """Activations from ACT2FN needed here (f32 in / f32 out)."""
    if name == "gelu_new":   # tanh approximation
        c = math.sqrt(2.0 / math.pi)
        return 0.5 * y * (1.0 + jnp.tanh(c * (y + 0.044715 * (y * y * y))))
    if name == "gelu":       # exact erf-based gelu
        return 0.5 * y * (1.0 + jax.lax.erf(y * (1.0 / math.sqrt(2.0))))
    if name == "relu":
        return jnp.maximum(y, 0.0)
    # TODO(synk): 'swish' / 'mish' activations.
    raise NotImplementedError(f"hidden_act={name!r}")


# ----------------------------------------------------------------------------
# Kernel 1: fused Q/K/V projection  (x read from HBM once)
# ----------------------------------------------------------------------------
def _qkv_kernel(x_ref, wq_ref, wk_ref, wv_ref, bq_ref, bk_ref, bv_ref,
                q_ref, k_ref, v_ref, *, compute_dtype):
    # In-kernel cast of the streamed activation: VPU work hidden under the MXU,
    # avoids a separate wrapper-side HBM cast pass.
    x = x_ref[...].astype(compute_dtype)
    q_ref[...] = (jnp.dot(x, wq_ref[...], preferred_element_type=jnp.float32)
                  + bq_ref[...]).astype(q_ref.dtype)
    k_ref[...] = (jnp.dot(x, wk_ref[...], preferred_element_type=jnp.float32)
                  + bk_ref[...]).astype(k_ref.dtype)
    v_ref[...] = (jnp.dot(x, wv_ref[...], preferred_element_type=jnp.float32)
                  + bv_ref[...]).astype(v_ref.dtype)


def _qkv_proj(x2, wq, bq, wk, bk, wv, bv, *, compute_dtype, block_m=None):
    m_rows, h_in = x2.shape
    h_out = wq.shape[1]
    bm = block_m or _auto_block_m(m_rows)
    row_in = pl.BlockSpec((bm, h_in), lambda i: (i, 0))
    row_out = pl.BlockSpec((bm, h_out), lambda i: (i, 0))
    w_spec = _resident_spec((h_in, h_out), lambda i: (0, 0))
    b_spec = _resident_spec((1, h_out), lambda i: (0, 0))
    out_sds = jax.ShapeDtypeStruct((m_rows, h_out), compute_dtype)
    return pl.pallas_call(
        functools.partial(_qkv_kernel, compute_dtype=compute_dtype),
        out_shape=(out_sds, out_sds, out_sds),
        grid_spec=pltpu.PrefetchScalarGridSpec(
            num_scalar_prefetch=0,
            grid=(pl.cdiv(m_rows, bm),),
            in_specs=[row_in, w_spec, w_spec, w_spec, b_spec, b_spec, b_spec],
            out_specs=[row_out, row_out, row_out],
        ),
        compiler_params=_compiler_params(),
    )(x2, wq, wk, wv, bq, bk, bv)


# ----------------------------------------------------------------------------
# Kernel 2: softmax attention, one (batch, head) per grid step
# ----------------------------------------------------------------------------
def _attention_kernel(q_ref, k_ref, v_ref, o_ref, *, scale):
    q = q_ref[0]                                  # (S, d) compute dtype
    k = k_ref[0]
    # scores = (q k^T) * scale, f32 MXU accumulation; contraction on the last
    # axes avoids an explicit in-kernel transpose of k.
    s = jax.lax.dot_general(q, k, (((1,), (1,)), ((), ())),
                            preferred_element_type=jnp.float32) * scale
    s = s - jnp.max(s, axis=-1, keepdims=True)    # numerically stable softmax
    p = jnp.exp(s)
    p = p / jnp.sum(p, axis=-1, keepdims=True)
    o = jnp.dot(p.astype(v_ref.dtype), v_ref[0],
                preferred_element_type=jnp.float32)
    o_ref[0] = o.astype(o_ref.dtype)


def _attention(qh, kh, vh, *, scale):
    bh, s_len, d = qh.shape
    spec = pl.BlockSpec((1, s_len, d), lambda i: (i, 0, 0))
    return pl.pallas_call(
        functools.partial(_attention_kernel, scale=scale),
        out_shape=jax.ShapeDtypeStruct((bh, s_len, d), qh.dtype),
        grid_spec=pltpu.PrefetchScalarGridSpec(
            num_scalar_prefetch=0,
            grid=(bh,),
            in_specs=[spec, spec, spec],
            out_specs=spec,
        ),
        compiler_params=_compiler_params(),
    )(qh, kh, vh)


# ----------------------------------------------------------------------------
# Kernel 3: dense + bias + residual add + LayerNorm   (BertSelfOutput / BertOutput)
# ----------------------------------------------------------------------------
def _dense_residual_ln_kernel(x_ref, wt_ref, b_ref, r_ref, g_ref, be_ref, o_ref,
                              *, eps, compute_dtype):
    x = x_ref[...].astype(compute_dtype)
    y = jnp.dot(x, wt_ref[...], preferred_element_type=jnp.float32) + b_ref[...]
    # dropout is the identity at inference.
    y = y + r_ref[...].astype(jnp.float32)        # residual add in f32
    mean = jnp.mean(y, axis=-1, keepdims=True)
    c = y - mean
    var = jnp.mean(c * c, axis=-1, keepdims=True)
    inv = jax.lax.rsqrt(var + eps)                # EUP slot, off the MXU path
    o_ref[...] = (c * inv * g_ref[...] + be_ref[...]).astype(o_ref.dtype)


def _dense_residual_layernorm(x2, resid2, wt, b, gamma, beta, *, eps,
                              compute_dtype, out_dtype, block_m=None):
    m_rows, k_in = x2.shape
    h = wt.shape[1]
    bm = block_m or _auto_block_m(m_rows)
    return pl.pallas_call(
        functools.partial(_dense_residual_ln_kernel, eps=eps,
                          compute_dtype=compute_dtype),
        out_shape=jax.ShapeDtypeStruct((m_rows, h), out_dtype),
        grid_spec=pltpu.PrefetchScalarGridSpec(
            num_scalar_prefetch=0,
            grid=(pl.cdiv(m_rows, bm),),
            in_specs=[
                pl.BlockSpec((bm, k_in), lambda i: (i, 0)),   # activation tile
                _resident_spec((k_in, h), lambda i: (0, 0)),  # weight [in,out]
                _resident_spec((1, h), lambda i: (0, 0)),     # dense bias
                pl.BlockSpec((bm, h), lambda i: (i, 0)),      # residual tile
                _resident_spec((1, h), lambda i: (0, 0)),     # LN gamma
                _resident_spec((1, h), lambda i: (0, 0)),     # LN beta
            ],
            out_specs=pl.BlockSpec((bm, h), lambda i: (i, 0)),  # lane-dense (full H)
        ),
        compiler_params=_compiler_params(),
    )(x2, wt, b, resid2, gamma, beta)


# ----------------------------------------------------------------------------
# Kernel 4: dense + bias + activation   (BertIntermediate)
# ----------------------------------------------------------------------------
def _dense_act_kernel(x_ref, wt_ref, b_ref, o_ref, *, compute_dtype, activation):
    x = x_ref[...].astype(compute_dtype)
    y = jnp.dot(x, wt_ref[...], preferred_element_type=jnp.float32) + b_ref[...]
    o_ref[...] = _activation(y, activation).astype(o_ref.dtype)


def _dense_act(x2, wt, b, *, activation, compute_dtype, out_dtype, block_m=None):
    m_rows, k_in = x2.shape
    n_out = wt.shape[1]
    bm = block_m or _auto_block_m(m_rows)
    return pl.pallas_call(
        functools.partial(_dense_act_kernel, compute_dtype=compute_dtype,
                          activation=activation),
        out_shape=jax.ShapeDtypeStruct((m_rows, n_out), out_dtype),
        grid_spec=pltpu.PrefetchScalarGridSpec(
            num_scalar_prefetch=0,
            grid=(pl.cdiv(m_rows, bm),),
            in_specs=[
                pl.BlockSpec((bm, k_in), lambda i: (i, 0)),
                _resident_spec((k_in, n_out), lambda i: (0, 0)),
                _resident_spec((1, n_out), lambda i: (0, 0)),
            ],
            out_specs=pl.BlockSpec((bm, n_out), lambda i: (i, 0)),
        ),
        compiler_params=_compiler_params(),
    )(x2, wt, b)


# ----------------------------------------------------------------------------
# Parameter preparation (one-time, at weight-load time)
# ----------------------------------------------------------------------------
def prepare_bert_layer_params(torch_params, compute_dtype=jnp.bfloat16):
    """Convert PyTorch-layout ([out, in], y = x @ W.T + b) weights into the
    kernel layout ([in, out], MXU compute dtype) ONCE.  Doing this per call
    would put an un-hidden XLA transpose+cast pass in front of every kernel."""
    def w(a):
        return jnp.asarray(a).T.astype(compute_dtype)

    def vec(a):
        return jnp.asarray(a).reshape(1, -1).astype(jnp.float32)

    p = torch_params
    return dict(
        wq=w(p["q_w"]), bq=vec(p["q_b"]),
        wk=w(p["k_w"]), bk=vec(p["k_b"]),
        wv=w(p["v_w"]), bv=vec(p["v_b"]),
        wo=w(p["o_w"]), bo=vec(p["o_b"]),
        ln1_g=vec(p["ln1_g"]), ln1_b=vec(p["ln1_b"]),
        wi=w(p["i_w"]), bi=vec(p["i_b"]),
        wo2=w(p["o2_w"]), bo2=vec(p["o2_b"]),
        ln2_g=vec(p["ln2_g"]), ln2_b=vec(p["ln2_b"]),
    )


# ----------------------------------------------------------------------------
# BertLayer forward
# ----------------------------------------------------------------------------
def bert_layer_forward(params, hidden_states, *, num_heads, eps=1e-12,
                       hidden_act="gelu_new", compute_dtype=jnp.bfloat16,
                       block_m=None, out_dtype=None, do_mlp=True):
    """BertLayer forward: self-attention -> SelfOutput LN -> (MLP -> Output LN).

    hidden_states: [B, S, H].  params: output of prepare_bert_layer_params
    built with the same compute_dtype.  out_dtype: final writeback dtype
    (default the hidden_states dtype; pass jnp.bfloat16 to halve the output
    HBM bytes on the HBM-bound generations when the consumer accepts bf16).
    """
    b, s, h = hidden_states.shape
    m = b * s
    d = h // num_heads
    out_dtype = out_dtype or hidden_states.dtype

    x2 = hidden_states.reshape(m, h)   # NO dtype cast here -- cast in-kernel

    # ---- BertSelfAttention --------------------------------------------------
    q2, k2, v2 = _qkv_proj(x2, params["wq"], params["bq"], params["wk"],
                           params["bk"], params["wv"], params["bv"],
                           compute_dtype=compute_dtype, block_m=block_m)

    def split_heads(t):   # [M, H] -> [B*nH, S, d]  (XLA transpose)
        return jnp.transpose(t.reshape(b, s, num_heads, d),
                             (0, 2, 1, 3)).reshape(b * num_heads, s, d)

    # TODO(synk): fuse head split/merge + attention_mask into a flash-style
    # kernel for long sequences; this per-(batch, head) kernel keeps the full
    # S x S score tile in VMEM and takes no mask.
    ctx = _attention(split_heads(q2), split_heads(k2), split_heads(v2),
                     scale=1.0 / math.sqrt(d))
    ctx2 = jnp.transpose(ctx.reshape(b, num_heads, s, d),
                         (0, 2, 1, 3)).reshape(m, h)

    # ---- BertSelfOutput: dense + bias + residual(f32) + LayerNorm ----------
    attn_out = _dense_residual_layernorm(
        ctx2, x2, params["wo"], params["bo"], params["ln1_g"], params["ln1_b"],
        eps=eps, compute_dtype=compute_dtype, out_dtype=compute_dtype,
        block_m=block_m)

    if not do_mlp:
        return attn_out.astype(out_dtype).reshape(b, s, h)

    # ---- BertIntermediate: dense + bias + activation ------------------------
    inter = _dense_act(attn_out, params["wi"], params["bi"],
                       activation=hidden_act, compute_dtype=compute_dtype,
                       out_dtype=compute_dtype, block_m=block_m)

    # ---- BertOutput: dense + bias + residual + LayerNorm --------------------
    out = _dense_residual_layernorm(
        inter, attn_out, params["wo2"], params["bo2"],
        params["ln2_g"], params["ln2_b"],
        eps=eps, compute_dtype=compute_dtype, out_dtype=out_dtype,
        block_m=block_m)

    return out.reshape(b, s, h)


# ----------------------------------------------------------------------------
# Pure-JAX f32 reference (mirrors the PyTorch forward, inference mode)
# ----------------------------------------------------------------------------
def _reference_bert_layer(tp, hidden_states, *, num_heads, eps, hidden_act):
    hi = jax.lax.Precision.HIGHEST
    x = hidden_states.astype(jnp.float32)
    b, s, h = x.shape
    d = h // num_heads

    def linear(t, w, bias):            # w: PyTorch [out, in]
        return jnp.einsum("...k,nk->...n", t, w, precision=hi) + bias

    q = linear(x, tp["q_w"], tp["q_b"])
    k = linear(x, tp["k_w"], tp["k_b"])
    v = linear(x, tp["v_w"], tp["v_b"])

    def heads(t):
        return t.reshape(b, s, num_heads, d).transpose(0, 2, 1, 3)

    scores = jnp.einsum("bhqd,bhkd->bhqk", heads(q), heads(k),
                        precision=hi) / math.sqrt(d)
    e = jnp.exp(scores - jnp.max(scores, axis=-1, keepdims=True))
    probs = e / jnp.sum(e, axis=-1, keepdims=True)
    ctx = jnp.einsum("bhqk,bhkd->bhqd", probs, heads(v), precision=hi)
    ctx = ctx.transpose(0, 2, 1, 3).reshape(b, s, h)

    def dense_res_ln(t, resid, w, bias, g, be):
        y = linear(t, w, bias) + resid
        mean = jnp.mean(y, axis=-1, keepdims=True)
        c = y - mean
        var = jnp.mean(c * c, axis=-1, keepdims=True)
        return c * jax.lax.rsqrt(var + eps) * g + be

    attn_out = dense_res_ln(ctx, x, tp["o_w"], tp["o_b"],
                            tp["ln1_g"], tp["ln1_b"])
    inter = _activation(linear(attn_out, tp["i_w"], tp["i_b"]), hidden_act)
    return dense_res_ln(inter, attn_out, tp["o2_w"], tp["o2_b"],
                        tp["ln2_g"], tp["ln2_b"])


# ----------------------------------------------------------------------------
# Demo / correctness check
# ----------------------------------------------------------------------------
if __name__ == "__main__":
    B, S, H = 2, 8, 32
    NUM_HEADS = 4
    INTERMEDIATE = 4 * H        # 128
    EPS = 1e-12
    ACT = "gelu_new"            # tanh-approx gelu; 'gelu' (erf) / 'relu' also supported

    key = jax.random.PRNGKey(0)
    ks = jax.random.split(key, 12)

    def kaiming_uniform(k, shape):   # kaiming_uniform_(a=sqrt(5)) ~ U(+-1/sqrt(fan_in))
        bound = 1.0 / np.sqrt(shape[1])
        return jax.random.uniform(k, shape, jnp.float32, -bound, bound)

    bH = 1.0 / np.sqrt(H)
    bI = 1.0 / np.sqrt(INTERMEDIATE)
    torch_params = {
        # BertSelfAttention: query/key are nn.Linear; value is the do_paths
        # Parameter (kaiming_uniform) with a zero value_bias.
        "q_w": kaiming_uniform(ks[0], (H, H)),
        "q_b": jax.random.uniform(ks[1], (H,), jnp.float32, -bH, bH),
        "k_w": kaiming_uniform(ks[2], (H, H)),
        "k_b": jax.random.uniform(ks[3], (H,), jnp.float32, -bH, bH),
        "v_w": kaiming_uniform(ks[4], (H, H)),
        "v_b": jnp.zeros((H,), jnp.float32),
        # BertSelfOutput: dense Parameter (kaiming), dense_bias zeros, LayerNorm.
        "o_w": kaiming_uniform(ks[5], (H, H)),
        "o_b": jnp.zeros((H,), jnp.float32),
        "ln1_g": jnp.ones((H,), jnp.float32),
        "ln1_b": jnp.zeros((H,), jnp.float32),
        # BertIntermediate / BertOutput (nn.Linear + LayerNorm).
        "i_w": kaiming_uniform(ks[6], (INTERMEDIATE, H)),
        "i_b": jax.random.uniform(ks[7], (INTERMEDIATE,), jnp.float32, -bH, bH),
        "o2_w": kaiming_uniform(ks[8], (H, INTERMEDIATE)),
        "o2_b": jax.random.uniform(ks[9], (H,), jnp.float32, -bI, bI),
        "ln2_g": jnp.ones((H,), jnp.float32),
        "ln2_b": jnp.zeros((H,), jnp.float32),
    }

    hidden_states = jax.random.normal(ks[10], (B, S, H), jnp.float32)

    ref = _reference_bert_layer(torch_params, hidden_states,
                                num_heads=NUM_HEADS, eps=EPS, hidden_act=ACT)

    # One-time weight conversion (transpose to [in,out] + cast) -- hoisted out
    # of the per-call path per the performance review.
    params_bf16 = prepare_bert_layer_params(torch_params, jnp.bfloat16)
    params_f32 = prepare_bert_layer_params(torch_params, jnp.float32)

    # 1) Default fast path: bf16 MXU operands / intermediates, bf16 writeback.
    out_bf16 = bert_layer_forward(params_bf16, hidden_states,
                                  num_heads=NUM_HEADS, eps=EPS, hidden_act=ACT,
                                  out_dtype=jnp.bfloat16)
    # 2) f32 path, single full-extent row tile (tight numeric check).
    out_f32 = bert_layer_forward(params_f32, hidden_states,
                                 num_heads=NUM_HEADS, eps=EPS, hidden_act=ACT,
                                 compute_dtype=jnp.float32)
    # 3) f32 path, multi-step row grid (exercises the pipelined grid).
    out_f32_multi = bert_layer_forward(params_f32, hidden_states,
                                       num_heads=NUM_HEADS, eps=EPS,
                                       hidden_act=ACT,
                                       compute_dtype=jnp.float32, block_m=8)

    out_bf16, out_f32, out_f32_multi = jax.block_until_ready(
        (out_bf16, out_f32, out_f32_multi))

    np.testing.assert_allclose(np.asarray(out_f32), np.asarray(ref),
                               atol=1e-3, rtol=1e-3)
    np.testing.assert_allclose(np.asarray(out_f32_multi), np.asarray(ref),
                               atol=1e-3, rtol=1e-3)
    np.testing.assert_allclose(np.asarray(out_bf16.astype(jnp.float32)),
                               np.asarray(ref), atol=8e-2, rtol=8e-2)

    print("KERNEL_OK")
</pallas_src>

<mosaic_0001>
module attributes {stable_mosaic.version = 11 : i64} {
  func.func @_qkv_kernel(%arg0: i32, %arg1: memref<16x32xf32, #tpu.memory_space<vmem>>, %arg2: memref<32x32xbf16, #tpu.memory_space<vmem>>, %arg3: memref<32x32xbf16, #tpu.memory_space<vmem>>, %arg4: memref<32x32xbf16, #tpu.memory_space<vmem>>, %arg5: memref<1x32xf32, #tpu.memory_space<vmem>>, %arg6: memref<1x32xf32, #tpu.memory_space<vmem>>, %arg7: memref<1x32xf32, #tpu.memory_space<vmem>>, %arg8: memref<16x32xbf16, #tpu.memory_space<vmem>>, %arg9: memref<16x32xbf16, #tpu.memory_space<vmem>>, %arg10: memref<16x32xbf16, #tpu.memory_space<vmem>>) attributes {dimension_semantics = [#tpu.dimension_semantics<parallel>], iteration_bounds = array<i64: 1>, scalar_prefetch = 0 : i64, scratch_operands = 0 : i64, tpu.core_type = #tpu.core_type<tc>, window_params = [{transform_indices = @transform_0, window_bounds = array<i64: 16, 32>}, {pipeline_mode = #tpu.pipeline_mode<synchronous>, transform_indices = @transform_1, window_bounds = array<i64: 32, 32>}, {pipeline_mode = #tpu.pipeline_mode<synchronous>, transform_indices = @transform_2, window_bounds = array<i64: 32, 32>}, {pipeline_mode = #tpu.pipeline_mode<synchronous>, transform_indices = @transform_3, window_bounds = array<i64: 32, 32>}, {pipeline_mode = #tpu.pipeline_mode<synchronous>, transform_indices = @transform_4, window_bounds = array<i64: 1, 32>}, {pipeline_mode = #tpu.pipeline_mode<synchronous>, transform_indices = @transform_5, window_bounds = array<i64: 1, 32>}, {pipeline_mode = #tpu.pipeline_mode<synchronous>, transform_indices = @transform_6, window_bounds = array<i64: 1, 32>}, {transform_indices = @transform_7, window_bounds = array<i64: 16, 32>}, {transform_indices = @transform_8, window_bounds = array<i64: 16, 32>}, {transform_indices = @transform_9, window_bounds = array<i64: 16, 32>}]} {
    %c0 = arith.constant 0 : index
    %c0_0 = arith.constant 0 : index
    %0 = vector.load %arg1[%c0, %c0_0] : memref<16x32xf32, #tpu.memory_space<vmem>>, vector<16x32xf32>
    %1 = arith.truncf %0 : vector<16x32xf32> to vector<16x32xbf16>
    %c0_1 = arith.constant 0 : index
    %c0_2 = arith.constant 0 : index
    %2 = vector.load %arg2[%c0_1, %c0_2] : memref<32x32xbf16, #tpu.memory_space<vmem>>, vector<32x32xbf16>
    %cst = arith.constant dense<0.000000e+00> : vector<16x32xf32>
    %3 = tpu.matmul %1, %2, %cst {dimension_numbers = #tpu.dot_dimension_numbers<[1], [0], [0], [1], [0, 0, 1, 1], [], []>} : vector<16x32xbf16>, vector<32x32xbf16>, vector<16x32xf32> -> vector<16x32xf32>
    %c0_3 = arith.constant 0 : index
    %c0_4 = arith.constant 0 : index
    %4 = vector.load %arg5[%c0_3, %c0_4] : memref<1x32xf32, #tpu.memory_space<vmem>>, vector<1x32xf32>
    %5 = vector.broadcast %4 : vector<1x32xf32> to vector<16x32xf32>
    %6 = arith.addf %3, %5 : vector<16x32xf32>
    %7 = arith.truncf %6 : vector<16x32xf32> to vector<16x32xbf16>
    %c0_5 = arith.constant 0 : index
    %c0_6 = arith.constant 0 : index
    %8 = vector.load %arg8[%c0_5, %c0_6] : memref<16x32xbf16, #tpu.memory_space<vmem>>, vector<16x32xbf16>
    tpu.vector_store %arg8[%c0_5, %c0_6], %7 {strides = array<i32>} : memref<16x32xbf16, #tpu.memory_space<vmem>>, vector<16x32xbf16>,
    %c0_7 = arith.constant 0 : index
    %c0_8 = arith.constant 0 : index
    %9 = vector.load %arg3[%c0_7, %c0_8] : memref<32x32xbf16, #tpu.memory_space<vmem>>, vector<32x32xbf16>
    %cst_9 = arith.constant dense<0.000000e+00> : vector<16x32xf32>
    %10 = tpu.matmul %1, %9, %cst_9 {dimension_numbers = #tpu.dot_dimension_numbers<[1], [0], [0], [1], [0, 0, 1, 1], [], []>} : vector<16x32xbf16>, vector<32x32xbf16>, vector<16x32xf32> -> vector<16x32xf32>
    %c0_10 = arith.constant 0 : index
    %c0_11 = arith.constant 0 : index
    %11 = vector.load %arg6[%c0_10, %c0_11] : memref<1x32xf32, #tpu.memory_space<vmem>>, vector<1x32xf32>
    %12 = vector.broadcast %11 : vector<1x32xf32> to vector<16x32xf32>
    %13 = arith.addf %10, %12 : vector<16x32xf32>
    %14 = arith.truncf %13 : vector<16x32xf32> to vector<16x32xbf16>
    %c0_12 = arith.constant 0 : index
    %c0_13 = arith.constant 0 : index
    %15 = vector.load %arg9[%c0_12, %c0_13] : memref<16x32xbf16, #tpu.memory_space<vmem>>, vector<16x32xbf16>
    tpu.vector_store %arg9[%c0_12, %c0_13], %14 {strides = array<i32>} : memref<16x32xbf16, #tpu.memory_space<vmem>>, vector<16x32xbf16>,
    %c0_14 = arith.constant 0 : index
    %c0_15 = arith.constant 0 : index
    %16 = vector.load %arg4[%c0_14, %c0_15] : memref<32x32xbf16, #tpu.memory_space<vmem>>, vector<32x32xbf16>
    %cst_16 = arith.constant dense<0.000000e+00> : vector<16x32xf32>
    %17 = tpu.matmul %1, %16, %cst_16 {dimension_numbers = #tpu.dot_dimension_numbers<[1], [0], [0], [1], [0, 0, 1, 1], [], []>} : vector<16x32xbf16>, vector<32x32xbf16>, vector<16x32xf32> -> vector<16x32xf32>
    %c0_17 = arith.constant 0 : index
    %c0_18 = arith.constant 0 : index
    %18 = vector.load %arg7[%c0_17, %c0_18] : memref<1x32xf32, #tpu.memory_space<vmem>>, vector<1x32xf32>
    %19 = vector.broadcast %18 : vector<1x32xf32> to vector<16x32xf32>
    %20 = arith.addf %17, %19 : vector<16x32xf32>
    %21 = arith.truncf %20 : vector<16x32xf32> to vector<16x32xbf16>
    %c0_19 = arith.constant 0 : index
    %c0_20 = arith.constant 0 : index
    %22 = vector.load %arg10[%c0_19, %c0_20] : memref<16x32xbf16, #tpu.memory_space<vmem>>, vector<16x32xbf16>
    tpu.vector_store %arg10[%c0_19, %c0_20], %21 {strides = array<i32>} : memref<16x32xbf16, #tpu.memory_space<vmem>>, vector<16x32xbf16>,
    return
  }
  func.func @transform_0(%arg0: i32) -> (i32, i32) {
    %c0_i32 = arith.constant 0 : i32
    %c0_i32_0 = arith.constant 0 : i32
    return %arg0, %c0_i32 : i32, i32
  }
  func.func @transform_1(%arg0: i32) -> (i32, i32) {
    %c0_i32 = arith.constant 0 : i32
    %c0_i32_0 = arith.constant 0 : i32
    %c0_i32_1 = arith.constant 0 : i32
    return %c0_i32, %c0_i32_0 : i32, i32
  }
  func.func @transform_2(%arg0: i32) -> (i32, i32) {
    %c0_i32 = arith.constant 0 : i32
    %c0_i32_0 = arith.constant 0 : i32
    %c0_i32_1 = arith.constant 0 : i32
    return %c0_i32, %c0_i32_0 : i32, i32
  }
  func.func @transform_3(%arg0: i32) -> (i32, i32) {
    %c0_i32 = arith.constant 0 : i32
    %c0_i32_0 = arith.constant 0 : i32
    %c0_i32_1 = arith.constant 0 : i32
    return %c0_i32, %c0_i32_0 : i32, i32
  }
  func.func @transform_4(%arg0: i32) -> (i32, i32) {
    %c0_i32 = arith.constant 0 : i32
    %c0_i32_0 = arith.constant 0 : i32
    %c0_i32_1 = arith.constant 0 : i32
    return %c0_i32, %c0_i32_0 : i32, i32
  }
  func.func @transform_5(%arg0: i32) -> (i32, i32) {
    %c0_i32 = arith.constant 0 : i32
    %c0_i32_0 = arith.constant 0 : i32
    %c0_i32_1 = arith.constant 0 : i32
    return %c0_i32, %c0_i32_0 : i32, i32
  }
  func.func @transform_6(%arg0: i32) -> (i32, i32) {
    %c0_i32 = arith.constant 0 : i32
    %c0_i32_0 = arith.constant 0 : i32
    %c0_i32_1 = arith.constant 0 : i32
    return %c0_i32, %c0_i32_0 : i32, i32
  }
  func.func @transform_7(%arg0: i32) -> (i32, i32) {
    %c0_i32 = arith.constant 0 : i32
    %c0_i32_0 = arith.constant 0 : i32
    return %arg0, %c0_i32 : i32, i32
  }
  func.func @transform_8(%arg0: i32) -> (i32, i32) {
    %c0_i32 = arith.constant 0 : i32
    %c0_i32_0 = arith.constant 0 : i32
    return %arg0, %c0_i32 : i32, i32
  }
  func.func @transform_9(%arg0: i32) -> (i32, i32) {
    %c0_i32 = arith.constant 0 : i32
    %c0_i32_0 = arith.constant 0 : i32
    return %arg0, %c0_i32 : i32, i32
  }
}

</mosaic_0001>

<llo_original>
// kernel: tpu_custom_call.1
$region0: #{tpu_custom_call.1}
  #allocation0 [shape = 'u32[]', space=smem, size = 0x4, offset = 0x4, fixed_abs, tag = 'smem constant byte address 0x4 - core index']
  #allocation1 [shape = 'u32[72,128]{1,0:T(1,128)}', space=vmem, size = 0x9000, scoped, tag = 'internal scratch']
  %s0 = inlined_call_operand.hbm [shape: f32[16,32], index: 0, kind: input, shape index: {}]
  %s1 = inlined_call_operand.hbm [shape: bf16[32,32], index: 1, kind: input, shape index: {}]
  %s2 = inlined_call_operand.hbm [shape: bf16[32,32], index: 2, kind: input, shape index: {}]
  %s3 = inlined_call_operand.hbm [shape: bf16[32,32], index: 3, kind: input, shape index: {}]
  %s4 = inlined_call_operand.vmem [shape: f32[1,32], index: 4, kind: input, shape index: {}]
  %s5 = inlined_call_operand.vmem [shape: f32[1,32], index: 5, kind: input, shape index: {}]
  %s6 = inlined_call_operand.vmem [shape: f32[1,32], index: 6, kind: input, shape index: {}]
  %s7 = inlined_call_operand.hbm [shape: bf16[16,32], index: 7, kind: output, shape index: {0}]
  %s8 = inlined_call_operand.hbm [shape: bf16[16,32], index: 8, kind: output, shape index: {1}]
  %s9 = inlined_call_operand.hbm [shape: bf16[16,32], index: 9, kind: output, shape index: {2}]
  %10 = xla_tuple %s7, %s8, %s9
  %s11 = sld [smem:[#allocation0]]
  $region70: #{tpu_custom_call.1} parent=0
    _
  %s13 = ssub.s32 1, %s11
  %s14 = scalar_select 0, %s13, %s11
  $region1: #{tpu_custom_call.1} parent=0
    #allocation2 [shape = 'u8[8192]{0}', space=vmem, size = 0x2000, scoped, tag = 'input window, operand 0, single buffered']
    #allocation3 [shape = 's32[1]{0}', space=sflag, size = 0x4, scoped, tag = 'scoped memory for tpu_custom_call.1']
    #allocation4 [shape = 's32[1]{0}', space=sflag, size = 0x4, scoped, tag = 'scoped memory for tpu_custom_call.1']
    #allocation5 [shape = 'u8[8192]{0}', space=vmem, size = 0x2000, scoped, tag = 'input window, operand 1, single buffered']
    #allocation6 [shape = 's32[1]{0}', space=sflag, size = 0x4, scoped, tag = 'scoped memory for tpu_custom_call.1']
    #allocation7 [shape = 'u8[8192]{0}', space=vmem, size = 0x2000, scoped, tag = 'input window, operand 2, single buffered']
    #allocation8 [shape = 'u8[8192]{0}', space=vmem, size = 0x2000, scoped, tag = 'input window, operand 3, single buffered']
    #allocation9 [shape = 's32[1]{0}', space=sflag, size = 0x4, scoped, tag = 'scoped memory for tpu_custom_call.1']
    #allocation10 [shape = 'u8[4096]{0}', space=vmem, size = 0x1000, scoped, tag = 'output window, operand 0, single buffered']
    #allocation11 [shape = 'u8[4096]{0}', space=vmem, size = 0x1000, scoped, tag = 'output window, operand 1, single buffered']
    #allocation12 [shape = 's32[1]{0}', space=sflag, size = 0x4, scoped, tag = 'scoped memory for tpu_custom_call.1']
    #allocation13 [shape = 'u8[4096]{0}', space=vmem, size = 0x1000, scoped, tag = 'output window, operand 2, single buffered']
    %15 = vsyncpa [#allocation3], 0
    %16 = vsyncpa [#allocation6], 0
    %17 = vsyncpa [#allocation9], 0
    %18 = vsyncpa [#allocation4], 0
    %19 = vsyncpa [#allocation12], 0
    // Predicated region
    $region2: #{tpu_custom_call.1} parent=1 // pred_check
      _
    $region3: #{tpu_custom_call.1} parent=1 // pred_check_branch
      %21 = sbr.rel (0) target = $region5
    $region4: #{tpu_custom_call.1} parent=1 // pred_region
      %23 = vsyncadd [#allocation3], 0
      %s24 = sshll.u32 %s0, 4
      %s25 = int_to_ptr.hbm [resolvable:$true] %s24
      %s26 = sshll.u32 [#allocation2], 4
      %s27 = int_to_ptr.vmem [resolvable:$true] %s26
      %32 = dma.hbm_to_vmem [thread:$0]  %s25, 256, %s27, [#allocation3], 128, 128, 8
    $region5: #{tpu_custom_call.1} parent=1 // pred_fallthru
      _
    // Predicated region
    $region6: #{tpu_custom_call.1} parent=1 // pred_check
      _
    $region7: #{tpu_custom_call.1} parent=1 // pred_check_branch
      %34 = sbr.rel (0) target = $region9
    $region8: #{tpu_custom_call.1} parent=1 // pred_region
      %36 = vsyncadd [#allocation6], 0
      %s37 = sshll.u32 %s1, 4
      %s38 = int_to_ptr.hbm [resolvable:$true] %s37
      %s39 = sshll.u32 [#allocation5], 4
      %s40 = int_to_ptr.vmem [resolvable:$true] %s39
      %45 = dma.hbm_to_vmem [thread:$0]  %s38, 256, %s40, [#allocation6], 64, 64, 4
    $region9: #{tpu_custom_call.1} parent=1 // pred_fallthru
      _
    // Predicated region
    $region10: #{tpu_custom_call.1} parent=1 // pred_check
      _
    $region11: #{tpu_custom_call.1} parent=1 // pred_check_branch
      %47 = sbr.rel (0) target = $region13
    $region12: #{tpu_custom_call.1} parent=1 // pred_region
      %49 = vsyncadd [#allocation6], 0
      %s50 = sshll.u32 %s2, 4
      %s51 = int_to_ptr.hbm [resolvable:$true] %s50
      %s52 = sshll.u32 [#allocation7], 4
      %s53 = int_to_ptr.vmem [resolvable:$true] %s52
      %58 = dma.hbm_to_vmem [thread:$0]  %s51, 256, %s53, [#allocation6], 64, 64, 4
    $region13: #{tpu_custom_call.1} parent=1 // pred_fallthru
      _
    // Predicated region
    $region14: #{tpu_custom_call.1} parent=1 // pred_check
      _
    $region15: #{tpu_custom_call.1} parent=1 // pred_check_branch
      %60 = sbr.rel (0) target = $region17
    $region16: #{tpu_custom_call.1} parent=1 // pred_region
      %62 = vsyncadd [#allocation9], 0
      %s63 = sshll.u32 %s3, 4
      %s64 = int_to_ptr.hbm [resolvable:$true] %s63
      %s65 = sshll.u32 [#allocation8], 4
      %s66 = int_to_ptr.vmem [resolvable:$true] %s65
      %71 = dma.hbm_to_vmem [thread:$0]  %s64, 256, %s66, [#allocation9], 64, 64, 4
    $region17: #{tpu_custom_call.1} parent=1 // pred_fallthru
      _
    // Predicated region
    $region18: #{tpu_custom_call.1} parent=1 // pred_check
      _
    $region19: #{tpu_custom_call.1} parent=1 // pred_check_branch
      %73 = sbr.rel (0) target = $region21
    $region20: #{tpu_custom_call.1} parent=1 // pred_region
      _
    $region21: #{tpu_custom_call.1} parent=1 // pred_fallthru
      _
    // Predicated region
    $region22: #{tpu_custom_call.1} parent=1 // pred_check
      _
    $region23: #{tpu_custom_call.1} parent=1 // pred_check_branch
      %75 = sbr.rel (0) target = $region25
    $region24: #{tpu_custom_call.1} parent=1 // pred_region
      _
    $region25: #{tpu_custom_call.1} parent=1 // pred_fallthru
      _
    // Predicated region
    $region26: #{tpu_custom_call.1} parent=1 // pred_check
      _
    $region27: #{tpu_custom_call.1} parent=1 // pred_check_branch
      %77 = sbr.rel (0) target = $region29
    $region28: #{tpu_custom_call.1} parent=1 // pred_region
      _
    $region29: #{tpu_custom_call.1} parent=1 // pred_fallthru
      _
    // Predicated region
    $region30: #{tpu_custom_call.1} parent=1 // pred_check
      _
    $region31: #{tpu_custom_call.1} parent=1 // pred_check_branch
      %79 = sbr.rel (0) target = $region33
    $region32: #{tpu_custom_call.1} parent=1 // pred_region
      %81 = dma.done [#allocation3], 256
    $region33: #{tpu_custom_call.1} parent=1 // pred_fallthru
      _
    // Predicated region
    $region34: #{tpu_custom_call.1} parent=1 // pred_check
      _
    $region35: #{tpu_custom_call.1} parent=1 // pred_check_branch
      %83 = sbr.rel (0) target = $region37
    $region36: #{tpu_custom_call.1} parent=1 // pred_region
      %85 = dma.done [#allocation6], 256
    $region37: #{tpu_custom_call.1} parent=1 // pred_fallthru
      _
    // Predicated region
    $region38: #{tpu_custom_call.1} parent=1 // pred_check
      _
    $region39: #{tpu_custom_call.1} parent=1 // pred_check_branch
      %87 = sbr.rel (0) target = $region41
    $region40: #{tpu_custom_call.1} parent=1 // pred_region
      %89 = dma.done [#allocation6], 256
    $region41: #{tpu_custom_call.1} parent=1 // pred_fallthru
      _
    // Predicated region
    $region42: #{tpu_custom_call.1} parent=1 // pred_check
      _
    $region43: #{tpu_custom_call.1} parent=1 // pred_check_branch
      %91 = sbr.rel (0) target = $region45
    $region44: #{tpu_custom_call.1} parent=1 // pred_region
      %93 = dma.done [#allocation9], 256
    $region45: #{tpu_custom_call.1} parent=1 // pred_fallthru
      _
    %v95 = vld [vmem:[#allocation2] sm:$0xff]
    %v96 = vld [vmem:[#allocation2 + $0x8] sm:$0xff]
    %v97 = vpack.c.bf16 %v96, %v95
    %v98 = vld [vmem:[#allocation5] sm:$0xf]
    %v99 = vld [vmem:[#allocation5 + $0x4] sm:$0xf]
    %v100 = vld [vmem:[#allocation5 + $0x8] sm:$0xf]
    %v101 = vld [vmem:[#allocation5 + $0xc] sm:$0xf]
    %v102 = vld [vmem:[%s4] sm:$0x1]
    %v104 = vperm.slane %v102, 0
    %v110 = vunpack.c.l.b16 %v98
    %v111 = vunpack.c.l.b16 %v99
    %v112 = vunpack.c.l.b16 %v100
    %v113 = vunpack.c.l.b16 %v101
    %v114 = vpack.c.b16 %v111, %v110
    %v115 = vpack.c.b16 %v113, %v112
    %vm118 = vcmask 261120
    %v120 = vsel %vm118, %v97, 0
    %122 = vmatpush.bf16.msra.mxu0 0
    %123 = vmatpush.bf16.msra.mxu0 0
    %124 = vmatpush.bf16.msra.mxu0 0
    %125 = vmatpush.bf16.msra.mxu0 0
    %126 = vmatpush.bf16.msra.mxu0 0
    %127 = vmatpush.bf16.msra.mxu0 0
    %128 = vmatpush.bf16.msra.mxu0 %v115
    %129 = vmatpush.bf16.msra.mxu0 %v114
    %130 = vmatmul.bf16.gmra.mxu0 %v120
    %v131 = vpop.f32.mrf.mxu0
    %v132 = vadd.f32 %v104, %v131
    %v133 = vpop.f32.mrf.mxu0
    %v134 = vadd.f32 %v104, %v133
    %135 = vdwg.mxu0
    %v136 = vpack.c.bf16 %v132, %v132
    %v137 = vpack.c.bf16 %v134, %v134
    %vm138 = vcmask 257024
    %139 = vst.msk [vmem:[#allocation10] sm:$0xf] %vm138, %v136
    %140 = vst.msk [vmem:[#allocation10 + $0x4] sm:$0xf] %vm138, %v137
    %v141 = vld [vmem:[#allocation7] sm:$0xf]
    %v142 = vld [vmem:[#allocation7 + $0x4] sm:$0xf]
    %v143 = vld [vmem:[#allocation7 + $0x8] sm:$0xf]
    %v144 = vld [vmem:[#allocation7 + $0xc] sm:$0xf]
    %v145 = vld [vmem:[%s5] sm:$0x1]
    %v147 = vperm.slane %v145, 0
    %v153 = vunpack.c.l.b16 %v141
    %v154 = vunpack.c.l.b16 %v142
    %v155 = vunpack.c.l.b16 %v143
    %v156 = vunpack.c.l.b16 %v144
    %v157 = vpack.c.b16 %v154, %v153
    %v158 = vpack.c.b16 %v156, %v155
    %161 = vmatpush.bf16.msra.mxu0 0
    %162 = vmatpush.bf16.msra.mxu0 0
    %163 = vmatpush.bf16.msra.mxu0 0
    %164 = vmatpush.bf16.msra.mxu0 0
    %165 = vmatpush.bf16.msra.mxu0 0
    %166 = vmatpush.bf16.msra.mxu0 0
    %167 = vmatpush.bf16.msra.mxu0 %v158
    %168 = vmatpush.bf16.msra.mxu0 %v157
    %169 = vmatmul.bf16.gmra.mxu0 %v120
    %v170 = vpop.f32.mrf.mxu0
    %v171 = vadd.f32 %v147, %v170
    %v172 = vpop.f32.mrf.mxu0
    %v173 = vadd.f32 %v147, %v172
    %174 = vdwg.mxu0
    %v175 = vpack.c.bf16 %v171, %v171
    %v176 = vpack.c.bf16 %v173, %v173
    %177 = vst.msk [vmem:[#allocation11] sm:$0xf] %vm138, %v175
    %178 = vst.msk [vmem:[#allocation11 + $0x4] sm:$0xf] %vm138, %v176
    %v179 = vld [vmem:[#allocation8] sm:$0xf]
    %v180 = vld [vmem:[#allocation8 + $0x4] sm:$0xf]
    %v181 = vld [vmem:[#allocation8 + $0x8] sm:$0xf]
    %v182 = vld [vmem:[#allocation8 + $0xc] sm:$0xf]
    %v183 = vld [vmem:[%s6] sm:$0x1]
    %v185 = vperm.slane %v183, 0
    %v191 = vunpack.c.l.b16 %v179
    %v192 = vunpack.c.l.b16 %v180
    %v193 = vunpack.c.l.b16 %v181
    %v194 = vunpack.c.l.b16 %v182
    %v195 = vpack.c.b16 %v192, %v191
    %v196 = vpack.c.b16 %v194, %v193
    %199 = vmatpush.bf16.msra.mxu0 0
    %200 = vmatpush.bf16.msra.mxu0 0
    %201 = vmatpush.bf16.msra.mxu0 0
    %202 = vmatpush.bf16.msra.mxu0 0
    %203 = vmatpush.bf16.msra.mxu0 0
    %204 = vmatpush.bf16.msra.mxu0 0
    %205 = vmatpush.bf16.msra.mxu0 %v196
    %206 = vmatpush.bf16.msra.mxu0 %v195
    %207 = vmatmul.bf16.gmra.mxu0 %v120
    %v208 = vpop.f32.mrf.mxu0
    %v209 = vadd.f32 %v185, %v208
    %v210 = vpop.f32.mrf.mxu0
    %v211 = vadd.f32 %v185, %v210
    %212 = vdwg.mxu0
    %v213 = vpack.c.bf16 %v209, %v209
    %v214 = vpack.c.bf16 %v211, %v211
    %215 = vst.msk [vmem:[#allocation13] sm:$0xf] %vm138, %v213
    %216 = vst.msk [vmem:[#allocation13 + $0x4] sm:$0xf] %vm138, %v214
    // Predicated region
    $region46: #{tpu_custom_call.1} parent=1 // pred_check
      _
    $region47: #{tpu_custom_call.1} parent=1 // pred_check_branch
      %218 = sbr.rel (0) target = $region49
    $region48: #{tpu_custom_call.1} parent=1 // pred_region
      %220 = vsyncadd [#allocation4], 0
      %s221 = sshll.u32 [#allocation10], 4
      %s222 = int_to_ptr.vmem [resolvable:$true] %s221
      %s223 = sshll.u32 %s7, 4
      %s224 = int_to_ptr.hbm [resolvable:$true] %s223
      %229 = dma.vmem_to_hbm [thread:$0]  %s222, 128, %s224, [#allocation4], 64, 64, 4
    $region49: #{tpu_custom_call.1} parent=1 // pred_fallthru
      _
    // Predicated region
    $region50: #{tpu_custom_call.1} parent=1 // pred_check
      _
    $region51: #{tpu_custom_call.1} parent=1 // pred_check_branch
      %231 = sbr.rel (0) target = $region53
    $region52: #{tpu_custom_call.1} parent=1 // pred_region
      %233 = vsyncadd [#allocation12], 0
      %s234 = sshll.u32 [#allocation11], 4
      %s235 = int_to_ptr.vmem [resolvable:$true] %s234
      %s236 = sshll.u32 %s8, 4
      %s237 = int_to_ptr.hbm [resolvable:$true] %s236
      %242 = dma.vmem_to_hbm [thread:$0]  %s235, 128, %s237, [#allocation12], 64, 64, 4
    $region53: #{tpu_custom_call.1} parent=1 // pred_fallthru
      _
    // Predicated region
    $region54: #{tpu_custom_call.1} parent=1 // pred_check
      _
    $region55: #{tpu_custom_call.1} parent=1 // pred_check_branch
      %244 = sbr.rel (0) target = $region57
    $region56: #{tpu_custom_call.1} parent=1 // pred_region
      %246 = vsyncadd [#allocation12], 0
      %s247 = sshll.u32 [#allocation13], 4
      %s248 = int_to_ptr.vmem [resolvable:$true] %s247
      %s249 = sshll.u32 %s9, 4
      %s250 = int_to_ptr.hbm [resolvable:$true] %s249
      %255 = dma.vmem_to_hbm [thread:$0]  %s248, 128, %s250, [#allocation12], 64, 64, 4
    $region57: #{tpu_custom_call.1} parent=1 // pred_fallthru
      _
    // Predicated region
    $region58: #{tpu_custom_call.1} parent=1 // pred_check
      _
    $region59: #{tpu_custom_call.1} parent=1 // pred_check_branch
      %257 = sbr.rel (0) target = $region61
    $region60: #{tpu_custom_call.1} parent=1 // pred_region
      %259 = dma.done [#allocation4], 128
    $region61: #{tpu_custom_call.1} parent=1 // pred_fallthru
      _
    // Predicated region
    $region62: #{tpu_custom_call.1} parent=1 // pred_check
      _
    $region63: #{tpu_custom_call.1} parent=1 // pred_check_branch
      %261 = sbr.rel (0) target = $region65
    $region64: #{tpu_custom_call.1} parent=1 // pred_region
      %263 = dma.done [#allocation12], 128
    $region65: #{tpu_custom_call.1} parent=1 // pred_fallthru
      _
    // Predicated region
    $region66: #{tpu_custom_call.1} parent=1 // pred_check
      _
    $region67: #{tpu_custom_call.1} parent=1 // pred_check_branch
      %265 = sbr.rel (0) target = $region69
    $region68: #{tpu_custom_call.1} parent=1 // pred_region
      %267 = dma.done [#allocation12], 128
    $region69: #{tpu_custom_call.1} parent=1 // pred_fallthru
      _
    %268 = vsyncpa [#allocation3], 1
    %269 = vsyncpa [#allocation6], 1
    %270 = vsyncpa [#allocation9], 1
    %271 = vsyncpa [#allocation4], 1
    %272 = vsyncpa [#allocation12], 1

</llo_original>
